<compile_context>
chip_gen: v7x
topology: tpu7x:2x2x1
jax: 0.10.0
libtpu: 0.0.40
codegen_flags: <defaults>
</compile_context>

<pallas_src>
import functools
import math

import jax
import jax.numpy as jnp
from jax.experimental import pallas as pl
from jax.experimental.pallas import tpu as pltpu


def add_margin_kernel(label_ref, x_ref, w_ref, out_ref, cos_ref, *, s, m, tile_c):
    """One grid step computes a (B, tile_c) slab of both outputs."""
    j = pl.program_id(0)

    x = x_ref[...].astype(jnp.float32)        # (B, D)        resident across the grid
    w = w_ref[...].astype(jnp.float32)        # (tile_c, D)   streamed weight tile

    # F.normalize semantics: v / max(||v||, 1e-12) == v * rsqrt(max(sum(v^2), 1e-24)).
    # rsqrt runs on the (otherwise idle) EUP slot; no VPU divides anywhere.
    w_inv = jax.lax.rsqrt(jnp.maximum(jnp.sum(w * w, axis=-1, keepdims=True), 1e-24))  # (tile_c, 1)
    x_inv = jax.lax.rsqrt(jnp.maximum(jnp.sum(x * x, axis=-1, keepdims=True), 1e-24))  # (B, 1)

    wn = w * w_inv                            # normalize the weight rows (lane-broadcast multiply)

    # cosine = (x @ wn^T) * x_inv : contraction on the last dim of BOTH operands, so the MXU
    # consumes the RHS-transposed form natively and no transposed tile copy is made.
    raw = jax.lax.dot_general(
        x, wn,
        dimension_numbers=(((1,), (1,)), ((), ())),
        preferred_element_type=jnp.float32,
    )                                         # (B, tile_c)
    cosine = raw * x_inv                      # fold the input-feature norm in post-matmul

    # one_hot.scatter_(1, label, 1): class index == label -> subtract the margin.
    cols = jax.lax.broadcasted_iota(jnp.int32, cosine.shape, 1) + j * tile_c
    one_hot = (cols == label_ref[...]).astype(jnp.float32)   # label_ref: (B, 1) int32

    # output = s * (one_hot*(cosine - m) + (1 - one_hot)*cosine) = s*cosine - (s*m)*one_hot
    out_ref[...] = cosine * s - one_hot * (s * m)
    cos_ref[...] = cosine


# Working-set target kept well under v7x's 64 MiB physical VMEM (smallest of v5e/v6e/v7x).
_VMEM_BUDGET = 24 * 1024 * 1024


def _workset_bytes(B, D, tile_c):
    weight = 2 * tile_c * D * 4            # weight tile, double-buffered
    outs = 2 * 2 * B * tile_c * 4          # two f32 output slabs, double-buffered
    resident = 2 * (B * D * 4 + B * 4)     # x + labels (counted double-buffered, conservative)
    return weight + outs + resident


def _pick_tile_c(B, D, C):
    def fits(tc):
        return _workset_bytes(B, D, tc) <= _VMEM_BUDGET

    # Small heads: collapse to a single grid step (removes all per-step overhead).
    if C <= 1024 and fits(C):
        return C
    # Large heads: biggest 128-multiple tile that divides C and fits the VMEM budget.
    # >=256 fills the 256-wide MXU N-dim on v6e/v7x; a grid of length >=2 also lets the
    # "parallel" class axis shard across the two v7x TensorCores.
    for tc in (1024, 512, 256, 128):
        if C % tc == 0 and fits(tc):
            return tc
    if fits(C):
        return C
    # Last resort: cdiv grid; Pallas pads the boundary block and drops OOB writes.
    return 128


def add_margin_product(x, weight, label, *, s=30.0, m=0.4, tile_c=None):
    B, D = x.shape
    C, D2 = weight.shape
    assert D == D2

    if tile_c is None:
        tile_c = _pick_tile_c(B, D, C)
    grid_c = pl.cdiv(C, tile_c)

    label2d = label.reshape(B, 1).astype(jnp.int32)
    kernel = functools.partial(add_margin_kernel, s=float(s), m=float(m), tile_c=tile_c)

    cp_kwargs = dict(dimension_semantics=("parallel",))
    est = _workset_bytes(B, D, tile_c)
    if est > (8 << 20):
        # Explicit scoped-VMEM limit with headroom; stays below v7x's 64 MiB physical VMEM.
        cp_kwargs["vmem_limit_bytes"] = int(min(max(2 * est, 32 << 20), 48 << 20))

    out, cosine = pl.pallas_call(
        kernel,
        out_shape=(
            jax.ShapeDtypeStruct((B, C), jnp.float32),
            jax.ShapeDtypeStruct((B, C), jnp.float32),
        ),
        grid_spec=pltpu.PrefetchScalarGridSpec(
            num_scalar_prefetch=0,
            grid=(grid_c,),
            in_specs=[
                pl.BlockSpec((B, 1), lambda j: (0, 0)),        # labels (resident)
                pl.BlockSpec((B, D), lambda j: (0, 0)),        # x (resident)
                pl.BlockSpec((tile_c, D), lambda j: (j, 0)),   # weight tile (streamed)
            ],
            out_specs=[
                pl.BlockSpec((B, tile_c), lambda j: (0, j)),   # output slab (lane-dense)
                pl.BlockSpec((B, tile_c), lambda j: (0, j)),   # cosine slab
            ],
        ),
        compiler_params=pltpu.CompilerParams(**cp_kwargs),
    )(label2d, x, weight)
    return out, cosine


def _reference(x, weight, label, s, m):
    xn = x / jnp.maximum(jnp.linalg.norm(x, axis=-1, keepdims=True), 1e-12)
    wn = weight / jnp.maximum(jnp.linalg.norm(weight, axis=-1, keepdims=True), 1e-12)
    cosine = xn @ wn.T
    one_hot = jax.nn.one_hot(label, weight.shape[0], dtype=cosine.dtype)
    out = (one_hot * (cosine - m) + (1.0 - one_hot) * cosine) * s
    return out, cosine


if __name__ == "__main__":
    # Small shapes consistent with the module: in_features=32, out_features=256, batch=8.
    B, D, C = 8, 32, 256
    s_val, m_val = 30.0, 0.4

    key = jax.random.PRNGKey(0)
    kx, kw, kl = jax.random.split(key, 3)

    x = jax.random.normal(kx, (B, D), dtype=jnp.float32)

    # Deterministic Xavier-uniform init for weight (out_features, in_features).
    bound = math.sqrt(6.0 / (D + C))
    weight = jax.random.uniform(kw, (C, D), dtype=jnp.float32, minval=-bound, maxval=bound)

    label = jax.random.randint(kl, (B,), 0, C, dtype=jnp.int32)

    out, cosine = add_margin_product(x, weight, label, s=s_val, m=m_val)
    out, cosine = jax.block_until_ready((out, cosine))

    out_ref, cos_ref = _reference(x, weight, label, s_val, m_val)
    assert jnp.allclose(cosine, cos_ref, atol=1e-4, rtol=1e-3), "cosine mismatch"
    assert jnp.allclose(out, out_ref, atol=3e-3, rtol=1e-3), "output mismatch"

    print("KERNEL_OK")
</pallas_src>

<mosaic_0001>
module attributes {stable_mosaic.version = 11 : i64} {
  func.func @add_margin_kernel(%arg0: i32, %arg1: memref<8x1xi32, #tpu.memory_space<vmem>>, %arg2: memref<8x32xf32, #tpu.memory_space<vmem>>, %arg3: memref<256x32xf32, #tpu.memory_space<vmem>>, %arg4: memref<8x256xf32, #tpu.memory_space<vmem>>, %arg5: memref<8x256xf32, #tpu.memory_space<vmem>>) attributes {dimension_semantics = [#tpu.dimension_semantics<parallel>], iteration_bounds = array<i64: 1>, scalar_prefetch = 0 : i64, scratch_operands = 0 : i64, tpu.core_type = #tpu.core_type<tc>, window_params = [{pipeline_mode = #tpu.pipeline_mode<synchronous>, transform_indices = @transform_0, window_bounds = array<i64: 8, 1>}, {pipeline_mode = #tpu.pipeline_mode<synchronous>, transform_indices = @transform_1, window_bounds = array<i64: 8, 32>}, {transform_indices = @transform_2, window_bounds = array<i64: 256, 32>}, {transform_indices = @transform_3, window_bounds = array<i64: 8, 256>}, {transform_indices = @transform_4, window_bounds = array<i64: 8, 256>}]} {
    %c0 = arith.constant 0 : index
    %c0_0 = arith.constant 0 : index
    %0 = vector.load %arg2[%c0, %c0_0] : memref<8x32xf32, #tpu.memory_space<vmem>>, vector<8x32xf32>
    %c0_1 = arith.constant 0 : index
    %c0_2 = arith.constant 0 : index
    %1 = vector.load %arg3[%c0_1, %c0_2] : memref<256x32xf32, #tpu.memory_space<vmem>>, vector<256x32xf32>
    %2 = arith.mulf %1, %1 : vector<256x32xf32>
    %cst = arith.constant dense<0.000000e+00> : vector<256xf32>
    %3 = vector.multi_reduction <add>, %2, %cst [1] : vector<256x32xf32> to vector<256xf32>
    %4 = vector.shape_cast %3 : vector<256xf32> to vector<256x1xf32>
    %cst_3 = arith.constant 1.000000e-24 : f32
    %5 = vector.broadcast %cst_3 : f32 to vector<256x1xf32>
    %6 = arith.maximumf %4, %5 : vector<256x1xf32>
    %7 = math.rsqrt %6 : vector<256x1xf32>
    %8 = arith.mulf %0, %0 : vector<8x32xf32>
    %cst_4 = arith.constant dense<0.000000e+00> : vector<8xf32>
    %9 = vector.multi_reduction <add>, %8, %cst_4 [1] : vector<8x32xf32> to vector<8xf32>
    %10 = vector.shape_cast %9 : vector<8xf32> to vector<8x1xf32>
    %cst_5 = arith.constant 1.000000e-24 : f32
    %11 = vector.broadcast %cst_5 : f32 to vector<8x1xf32>
    %12 = arith.maximumf %10, %11 : vector<8x1xf32>
    %13 = math.rsqrt %12 : vector<8x1xf32>
    %14 = vector.broadcast %7 : vector<256x1xf32> to vector<256x32xf32>
    %15 = arith.mulf %1, %14 : vector<256x32xf32>
    %cst_6 = arith.constant dense<0.000000e+00> : vector<8x256xf32>
    %16 = tpu.matmul %0, %15, %cst_6 {dimension_numbers = #tpu.dot_dimension_numbers<[1], [1], [0], [0], [0, 0, 1, 0], [], []>} : vector<8x32xf32>, vector<256x32xf32>, vector<8x256xf32> -> vector<8x256xf32>
    %17 = vector.broadcast %13 : vector<8x1xf32> to vector<8x256xf32>
    %18 = arith.mulf %16, %17 : vector<8x256xf32>
    %19 = tpu.iota {dimensions = array<i32: 1>} : vector<8x256xi32>
    %c256_i32 = arith.constant 256 : i32
    %20 = arith.muli %arg0, %c256_i32 : i32
    %21 = vector.broadcast %20 : i32 to vector<8x256xi32>
    %22 = arith.addi %19, %21 : vector<8x256xi32>
    %c0_7 = arith.constant 0 : index
    %c0_8 = arith.constant 0 : index
    %23 = vector.load %arg1[%c0_7, %c0_8] : memref<8x1xi32, #tpu.memory_space<vmem>>, vector<8x1xi32>
    %24 = vector.broadcast %23 : vector<8x1xi32> to vector<8x256xi32>
    %25 = arith.cmpi eq, %22, %24 : vector<8x256xi32>
    %26 = arith.extui %25 : vector<8x256xi1> to vector<8x256xi32>
    %27 = arith.sitofp %26 : vector<8x256xi32> to vector<8x256xf32>
    %cst_9 = arith.constant 3.000000e+01 : f32
    %28 = vector.broadcast %cst_9 : f32 to vector<8x256xf32>
    %29 = arith.mulf %18, %28 : vector<8x256xf32>
    %cst_10 = arith.constant 1.200000e+01 : f32
    %30 = vector.broadcast %cst_10 : f32 to vector<8x256xf32>
    %31 = arith.mulf %27, %30 : vector<8x256xf32>
    %32 = arith.subf %29, %31 : vector<8x256xf32>
    %c0_11 = arith.constant 0 : index
    %c0_12 = arith.constant 0 : index
    %33 = vector.load %arg4[%c0_11, %c0_12] : memref<8x256xf32, #tpu.memory_space<vmem>>, vector<8x256xf32>
    tpu.vector_store %arg4[%c0_11, %c0_12], %32 {strides = array<i32>} : memref<8x256xf32, #tpu.memory_space<vmem>>, vector<8x256xf32>,
    %c0_13 = arith.constant 0 : index
    %c0_14 = arith.constant 0 : index
    %34 = vector.load %arg5[%c0_13, %c0_14] : memref<8x256xf32, #tpu.memory_space<vmem>>, vector<8x256xf32>
    tpu.vector_store %arg5[%c0_13, %c0_14], %18 {strides = array<i32>} : memref<8x256xf32, #tpu.memory_space<vmem>>, vector<8x256xf32>,
    return
  }
  func.func @transform_0(%arg0: i32) -> (i32, i32) {
    %c0_i32 = arith.constant 0 : i32
    %c0_i32_0 = arith.constant 0 : i32
    %c0_i32_1 = arith.constant 0 : i32
    return %c0_i32, %c0_i32_0 : i32, i32
  }
  func.func @transform_1(%arg0: i32) -> (i32, i32) {
    %c0_i32 = arith.constant 0 : i32
    %c0_i32_0 = arith.constant 0 : i32
    %c0_i32_1 = arith.constant 0 : i32
    return %c0_i32, %c0_i32_0 : i32, i32
  }
  func.func @transform_2(%arg0: i32) -> (i32, i32) {
    %c0_i32 = arith.constant 0 : i32
    %c0_i32_0 = arith.constant 0 : i32
    return %arg0, %c0_i32 : i32, i32
  }
  func.func @transform_3(%arg0: i32) -> (i32, i32) {
    %c0_i32 = arith.constant 0 : i32
    %c0_i32_0 = arith.constant 0 : i32
    return %c0_i32, %arg0 : i32, i32
  }
  func.func @transform_4(%arg0: i32) -> (i32, i32) {
    %c0_i32 = arith.constant 0 : i32
    %c0_i32_0 = arith.constant 0 : i32
    return %c0_i32, %arg0 : i32, i32
  }
}

</mosaic_0001>

<llo_original>
// kernel: tpu_custom_call.1
$region0: #{tpu_custom_call.1}
  #allocation0 [shape = 'u32[]', space=smem, size = 0x4, offset = 0x4, fixed_abs, tag = 'smem constant byte address 0x4 - core index']
  #allocation1 [shape = 'u32[144,128]{1,0:T(1,128)}', space=vmem, size = 0x12000, scoped, tag = 'internal scratch']
  %s0 = inlined_call_operand.vmem [shape: s32[8,1], index: 0, kind: input, shape index: {}]
  %s1 = inlined_call_operand.vmem [shape: f32[8,32], index: 1, kind: input, shape index: {}]
  %s2 = inlined_call_operand.vmem [shape: f32[256,32], index: 2, kind: input, shape index: {}]
  %s3 = inlined_call_operand.hbm [shape: f32[8,256], index: 3, kind: output, shape index: {0}]
  %s4 = inlined_call_operand.hbm [shape: f32[8,256], index: 4, kind: output, shape index: {1}]
  %5 = xla_tuple %s3, %s4
  %s6 = sld [smem:[#allocation0]]
  $region30: #{tpu_custom_call.1} parent=0
    _
  %s8 = ssub.s32 1, %s6
  %s9 = scalar_select 0, %s8, %s6
  $region1: #{tpu_custom_call.1} parent=0
    #allocation2 [shape = 'u8[8192]{0}', space=vmem, size = 0x2000, scoped, tag = 'output window, operand 0, single buffered']
    #allocation3 [shape = 's32[1]{0}', space=sflag, size = 0x4, scoped, tag = 'scoped memory for tpu_custom_call.1']
    #allocation4 [shape = 'u8[8192]{0}', space=vmem, size = 0x2000, scoped, tag = 'output window, operand 1, single buffered']
    #allocation5 [shape = 's32[1]{0}', space=sflag, size = 0x4, scoped, tag = 'scoped memory for tpu_custom_call.1']
    %10 = vsyncpa [#allocation3], 0
    %11 = vsyncpa [#allocation5], 0
    // Predicated region
    $region2: #{tpu_custom_call.1} parent=1 // pred_check
      _
    $region3: #{tpu_custom_call.1} parent=1 // pred_check_branch
      %13 = sbr.rel (0) target = $region5
    $region4: #{tpu_custom_call.1} parent=1 // pred_region
      _
    $region5: #{tpu_custom_call.1} parent=1 // pred_fallthru
      _
    // Predicated region
    $region6: #{tpu_custom_call.1} parent=1 // pred_check
      _
    $region7: #{tpu_custom_call.1} parent=1 // pred_check_branch
      %15 = sbr.rel (0) target = $region9
    $region8: #{tpu_custom_call.1} parent=1 // pred_region
      _
    $region9: #{tpu_custom_call.1} parent=1 // pred_fallthru
      _
    // Predicated region
    $region10: #{tpu_custom_call.1} parent=1 // pred_check
      _
    $region11: #{tpu_custom_call.1} parent=1 // pred_check_branch
      %17 = sbr.rel (0) target = $region13
    $region12: #{tpu_custom_call.1} parent=1 // pred_region
      _
    $region13: #{tpu_custom_call.1} parent=1 // pred_fallthru
      _
    %v18 = vld [vmem:[%s1] sm:$0xff]
    %v19 = vld [vmem:[%s2] sm:$0xff]
    %v20 = vld [vmem:[%s2 + $0x8] sm:$0xff]
    %v21 = vld [vmem:[%s2 + $0x10] sm:$0xff]
    %v22 = vld [vmem:[%s2 + $0x18] sm:$0xff]
    %v23 = vld [vmem:[%s2 + $0x20] sm:$0xff]
    %v24 = vld [vmem:[%s2 + $0x28] sm:$0xff]
    %v25 = vld [vmem:[%s2 + $0x30] sm:$0xff]
    %v26 = vld [vmem:[%s2 + $0x38] sm:$0xff]
    %v27 = vld [vmem:[%s2 + $0x40] sm:$0xff]
    %v28 = vld [vmem:[%s2 + $0x48] sm:$0xff]
    %v29 = vld [vmem:[%s2 + $0x50] sm:$0xff]
    %v30 = vld [vmem:[%s2 + $0x58] sm:$0xff]
    %v31 = vld [vmem:[%s2 + $0x60] sm:$0xff]
    %v32 = vld [vmem:[%s2 + $0x68] sm:$0xff]
    %v33 = vld [vmem:[%s2 + $0x70] sm:$0xff]
    %v34 = vld [vmem:[%s2 + $0x78] sm:$0xff]
    %v35 = vld [vmem:[%s2 + $0x80] sm:$0xff]
    %v36 = vld [vmem:[%s2 + $0x88] sm:$0xff]
    %v37 = vld [vmem:[%s2 + $0x90] sm:$0xff]
    %v38 = vld [vmem:[%s2 + $0x98] sm:$0xff]
    %v39 = vld [vmem:[%s2 + $0xa0] sm:$0xff]
    %v40 = vld [vmem:[%s2 + $0xa8] sm:$0xff]
    %v41 = vld [vmem:[%s2 + $0xb0] sm:$0xff]
    %v42 = vld [vmem:[%s2 + $0xb8] sm:$0xff]
    %v43 = vld [vmem:[%s2 + $0xc0] sm:$0xff]
    %v44 = vld [vmem:[%s2 + $0xc8] sm:$0xff]
    %v45 = vld [vmem:[%s2 + $0xd0] sm:$0xff]
    %v46 = vld [vmem:[%s2 + $0xd8] sm:$0xff]
    %v47 = vld [vmem:[%s2 + $0xe0] sm:$0xff]
    %v48 = vld [vmem:[%s2 + $0xe8] sm:$0xff]
    %v49 = vld [vmem:[%s2 + $0xf0] sm:$0xff]
    %v50 = vld [vmem:[%s2 + $0xf8] sm:$0xff]
    %v51 = vmul.f32 %v19, %v19
    %v52 = vmul.f32 %v20, %v20
    %v53 = vmul.f32 %v21, %v21
    %v54 = vmul.f32 %v22, %v22
    %v55 = vmul.f32 %v23, %v23
    %v56 = vmul.f32 %v24, %v24
    %v57 = vmul.f32 %v25, %v25
    %v58 = vmul.f32 %v26, %v26
    %v59 = vmul.f32 %v27, %v27
    %v60 = vmul.f32 %v28, %v28
    %v61 = vmul.f32 %v29, %v29
    %v62 = vmul.f32 %v30, %v30
    %v63 = vmul.f32 %v31, %v31
    %v64 = vmul.f32 %v32, %v32
    %v65 = vmul.f32 %v33, %v33
    %v66 = vmul.f32 %v34, %v34
    %v67 = vmul.f32 %v35, %v35
    %v68 = vmul.f32 %v36, %v36
    %v69 = vmul.f32 %v37, %v37
    %v70 = vmul.f32 %v38, %v38
    %v71 = vmul.f32 %v39, %v39
    %v72 = vmul.f32 %v40, %v40
    %v73 = vmul.f32 %v41, %v41
    %v74 = vmul.f32 %v42, %v42
    %v75 = vmul.f32 %v43, %v43
    %v76 = vmul.f32 %v44, %v44
    %v77 = vmul.f32 %v45, %v45
    %v78 = vmul.f32 %v46, %v46
    %v79 = vmul.f32 %v47, %v47
    %v80 = vmul.f32 %v48, %v48
    %v81 = vmul.f32 %v49, %v49
    %v82 = vmul.f32 %v50, %v50
    %vm83 = vcmask 261120
    %v84 = vsel %vm83, %v51, 0.0
    %85 = vadd.xlane.f32.xlu0 %v84
    %v86 = vpop.xlane.xlu0 %85
    %v87 = vsel %vm83, %v52, 0.0
    %88 = vadd.xlane.f32.xlu0 %v87
    %v89 = vpop.xlane.xlu0 %88
    %v90 = vsel %vm83, %v53, 0.0
    %91 = vadd.xlane.f32.xlu0 %v90
    %v92 = vpop.xlane.xlu0 %91
    %v93 = vsel %vm83, %v54, 0.0
    %94 = vadd.xlane.f32.xlu0 %v93
    %v95 = vpop.xlane.xlu0 %94
    %v96 = vsel %vm83, %v55, 0.0
    %97 = vadd.xlane.f32.xlu0 %v96
    %v98 = vpop.xlane.xlu0 %97
    %v99 = vsel %vm83, %v56, 0.0
    %100 = vadd.xlane.f32.xlu0 %v99
    %v101 = vpop.xlane.xlu0 %100
    %v102 = vsel %vm83, %v57, 0.0
    %103 = vadd.xlane.f32.xlu0 %v102
    %v104 = vpop.xlane.xlu0 %103
    %v105 = vsel %vm83, %v58, 0.0
    %106 = vadd.xlane.f32.xlu0 %v105
    %v107 = vpop.xlane.xlu0 %106
    %v108 = vsel %vm83, %v59, 0.0
    %109 = vadd.xlane.f32.xlu0 %v108
    %v110 = vpop.xlane.xlu0 %109
    %v111 = vsel %vm83, %v60, 0.0
    %112 = vadd.xlane.f32.xlu0 %v111
    %v113 = vpop.xlane.xlu0 %112
    %v114 = vsel %vm83, %v61, 0.0
    %115 = vadd.xlane.f32.xlu0 %v114
    %v116 = vpop.xlane.xlu0 %115
    %v117 = vsel %vm83, %v62, 0.0
    %118 = vadd.xlane.f32.xlu0 %v117
    %v119 = vpop.xlane.xlu0 %118
    %v120 = vsel %vm83, %v63, 0.0
    %121 = vadd.xlane.f32.xlu0 %v120
    %v122 = vpop.xlane.xlu0 %121
    %v123 = vsel %vm83, %v64, 0.0
    %124 = vadd.xlane.f32.xlu0 %v123
    %v125 = vpop.xlane.xlu0 %124
    %v126 = vsel %vm83, %v65, 0.0
    %127 = vadd.xlane.f32.xlu0 %v126
    %v128 = vpop.xlane.xlu0 %127
    %v129 = vsel %vm83, %v66, 0.0
    %130 = vadd.xlane.f32.xlu0 %v129
    %v131 = vpop.xlane.xlu0 %130
    %v132 = vsel %vm83, %v67, 0.0
    %133 = vadd.xlane.f32.xlu0 %v132
    %v134 = vpop.xlane.xlu0 %133
    %v135 = vsel %vm83, %v68, 0.0
    %136 = vadd.xlane.f32.xlu0 %v135
    %v137 = vpop.xlane.xlu0 %136
    %v138 = vsel %vm83, %v69, 0.0
    %139 = vadd.xlane.f32.xlu0 %v138
    %v140 = vpop.xlane.xlu0 %139
    %v141 = vsel %vm83, %v70, 0.0
    %142 = vadd.xlane.f32.xlu0 %v141
    %v143 = vpop.xlane.xlu0 %142
    %v144 = vsel %vm83, %v71, 0.0
    %145 = vadd.xlane.f32.xlu0 %v144
    %v146 = vpop.xlane.xlu0 %145
    %v147 = vsel %vm83, %v72, 0.0
    %148 = vadd.xlane.f32.xlu0 %v147
    %v149 = vpop.xlane.xlu0 %148
    %v150 = vsel %vm83, %v73, 0.0
    %151 = vadd.xlane.f32.xlu0 %v150
    %v152 = vpop.xlane.xlu0 %151
    %v153 = vsel %vm83, %v74, 0.0
    %154 = vadd.xlane.f32.xlu0 %v153
    %v155 = vpop.xlane.xlu0 %154
    %v156 = vsel %vm83, %v75, 0.0
    %157 = vadd.xlane.f32.xlu0 %v156
    %v158 = vpop.xlane.xlu0 %157
    %v159 = vsel %vm83, %v76, 0.0
    %160 = vadd.xlane.f32.xlu0 %v159
    %v161 = vpop.xlane.xlu0 %160
    %v162 = vsel %vm83, %v77, 0.0
    %163 = vadd.xlane.f32.xlu0 %v162
    %v164 = vpop.xlane.xlu0 %163
    %v165 = vsel %vm83, %v78, 0.0
    %166 = vadd.xlane.f32.xlu0 %v165
    %v167 = vpop.xlane.xlu0 %166
    %v168 = vsel %vm83, %v79, 0.0
    %169 = vadd.xlane.f32.xlu0 %v168
    %v170 = vpop.xlane.xlu0 %169
    %v171 = vsel %vm83, %v80, 0.0
    %172 = vadd.xlane.f32.xlu0 %v171
    %v173 = vpop.xlane.xlu0 %172
    %v174 = vsel %vm83, %v81, 0.0
    %175 = vadd.xlane.f32.xlu0 %v174
    %v176 = vpop.xlane.xlu0 %175
    %v177 = vsel %vm83, %v82, 0.0
    %178 = vadd.xlane.f32.xlu0 %v177
    %v179 = vpop.xlane.xlu0 %178
    %v180 = vmax.f32 %v86, 1e-24
    %v181 = vmax.f32 %v89, 1e-24
    %v182 = vmax.f32 %v92, 1e-24
    %v183 = vmax.f32 %v95, 1e-24
    %v184 = vmax.f32 %v98, 1e-24
    %v185 = vmax.f32 %v101, 1e-24
    %v186 = vmax.f32 %v104, 1e-24
    %v187 = vmax.f32 %v107, 1e-24
    %v188 = vmax.f32 %v110, 1e-24
    %v189 = vmax.f32 %v113, 1e-24
    %v190 = vmax.f32 %v116, 1e-24
    %v191 = vmax.f32 %v119, 1e-24
    %v192 = vmax.f32 %v122, 1e-24
    %v193 = vmax.f32 %v125, 1e-24
    %v194 = vmax.f32 %v128, 1e-24
    %v195 = vmax.f32 %v131, 1e-24
    %v196 = vmax.f32 %v134, 1e-24
    %v197 = vmax.f32 %v137, 1e-24
    %v198 = vmax.f32 %v140, 1e-24
    %v199 = vmax.f32 %v143, 1e-24
    %v200 = vmax.f32 %v146, 1e-24
    %v201 = vmax.f32 %v149, 1e-24
    %v202 = vmax.f32 %v152, 1e-24
    %v203 = vmax.f32 %v155, 1e-24
    %v204 = vmax.f32 %v158, 1e-24
    %v205 = vmax.f32 %v161, 1e-24
    %v206 = vmax.f32 %v164, 1e-24
    %v207 = vmax.f32 %v167, 1e-24
    %v208 = vmax.f32 %v170, 1e-24
    %v209 = vmax.f32 %v173, 1e-24
    %v210 = vmax.f32 %v176, 1e-24
    %v211 = vmax.f32 %v179, 1e-24
    %v212 = vrsqrt.pop %v180
    %v213 = vrsqrt.pop %v181
    %v214 = vrsqrt.pop %v182
    %v215 = vrsqrt.pop %v183
    %v216 = vrsqrt.pop %v184
    %v217 = vrsqrt.pop %v185
    %v218 = vrsqrt.pop %v186
    %v219 = vrsqrt.pop %v187
    %v220 = vrsqrt.pop %v188
    %v221 = vrsqrt.pop %v189
    %v222 = vrsqrt.pop %v190
    %v223 = vrsqrt.pop %v191
    %v224 = vrsqrt.pop %v192
    %v225 = vrsqrt.pop %v193
    %v226 = vrsqrt.pop %v194
    %v227 = vrsqrt.pop %v195
    %v228 = vrsqrt.pop %v196
    %v229 = vrsqrt.pop %v197
    %v230 = vrsqrt.pop %v198
    %v231 = vrsqrt.pop %v199
    %v232 = vrsqrt.pop %v200
    %v233 = vrsqrt.pop %v201
    %v234 = vrsqrt.pop %v202
    %v235 = vrsqrt.pop %v203
    %v236 = vrsqrt.pop %v204
    %v237 = vrsqrt.pop %v205
    %v238 = vrsqrt.pop %v206
    %v239 = vrsqrt.pop %v207
    %v240 = vrsqrt.pop %v208
    %v241 = vrsqrt.pop %v209
    %v242 = vrsqrt.pop %v210
    %v243 = vrsqrt.pop %v211
    %v244 = vmul.f32 %v18, %v18
    %v245 = vsel %vm83, %v244, 0.0
    %246 = vadd.xlane.f32.xlu0 %v245
    %v247 = vpop.xlane.xlu0 %246
    %v248 = vmax.f32 %v247, 1e-24
    %v249 = vrsqrt.pop %v248
    %v250 = vmul.f32 %v19, %v212
    %v251 = vmul.f32 %v20, %v213
    %v252 = vmul.f32 %v21, %v214
    %v253 = vmul.f32 %v22, %v215
    %v254 = vmul.f32 %v23, %v216
    %v255 = vmul.f32 %v24, %v217
    %v256 = vmul.f32 %v25, %v218
    %v257 = vmul.f32 %v26, %v219
    %v258 = vmul.f32 %v27, %v220
    %v259 = vmul.f32 %v28, %v221
    %v260 = vmul.f32 %v29, %v222
    %v261 = vmul.f32 %v30, %v223
    %v262 = vmul.f32 %v31, %v224
    %v263 = vmul.f32 %v32, %v225
    %v264 = vmul.f32 %v33, %v226
    %v265 = vmul.f32 %v34, %v227
    %v266 = vmul.f32 %v35, %v228
    %v267 = vmul.f32 %v36, %v229
    %v268 = vmul.f32 %v37, %v230
    %v269 = vmul.f32 %v38, %v231
    %v270 = vmul.f32 %v39, %v232
    %v271 = vmul.f32 %v40, %v233
    %v272 = vmul.f32 %v41, %v234
    %v273 = vmul.f32 %v42, %v235
    %v274 = vmul.f32 %v43, %v236
    %v275 = vmul.f32 %v44, %v237
    %v276 = vmul.f32 %v45, %v238
    %v277 = vmul.f32 %v46, %v239
    %v278 = vmul.f32 %v47, %v240
    %v279 = vmul.f32 %v48, %v241
    %v280 = vmul.f32 %v49, %v242
    %v281 = vmul.f32 %v50, %v243
    %v283 = vsel %vm83, %v18, 0
    %v286 = vsel %vm83, %v250, 0
    %v289 = vsel %vm83, %v251, 0
    %v292 = vsel %vm83, %v252, 0
    %v295 = vsel %vm83, %v253, 0
    %v298 = vsel %vm83, %v254, 0
    %v301 = vsel %vm83, %v255, 0
    %v304 = vsel %vm83, %v256, 0
    %v307 = vsel %vm83, %v257, 0
    %v310 = vsel %vm83, %v258, 0
    %v313 = vsel %vm83, %v259, 0
    %v316 = vsel %vm83, %v260, 0
    %v319 = vsel %vm83, %v261, 0
    %v322 = vsel %vm83, %v262, 0
    %v325 = vsel %vm83, %v263, 0
    %v328 = vsel %vm83, %v264, 0
    %v331 = vsel %vm83, %v265, 0
    %v334 = vsel %vm83, %v266, 0
    %v337 = vsel %vm83, %v267, 0
    %v340 = vsel %vm83, %v268, 0
    %v343 = vsel %vm83, %v269, 0
    %v346 = vsel %vm83, %v270, 0
    %v349 = vsel %vm83, %v271, 0
    %v352 = vsel %vm83, %v272, 0
    %v355 = vsel %vm83, %v273, 0
    %v358 = vsel %vm83, %v274, 0
    %v361 = vsel %vm83, %v275, 0
    %v364 = vsel %vm83, %v276, 0
    %v367 = vsel %vm83, %v277, 0
    %v370 = vsel %vm83, %v278, 0
    %v373 = vsel %vm83, %v279, 0
    %v376 = vsel %vm83, %v280, 0
    %v379 = vsel %vm83, %v281, 0
    %381 = vmatprep.subr.mxu0 0.0
    %382 = vmatpush1.xpose.msra.mxu0 %v286
    %383 = vmatprep.subr.mxu0 0.0
    %384 = vmatpush1.xpose.msra.mxu0 %v289
    %385 = vmatprep.subr.mxu0 0.0
    %386 = vmatpush1.xpose.msra.mxu0 %v292
    %387 = vmatprep.subr.mxu0 0.0
    %388 = vmatpush1.xpose.msra.mxu0 %v295
    %389 = vmatprep.subr.mxu0 0.0
    %390 = vmatpush1.xpose.msra.mxu0 %v298
    %391 = vmatprep.subr.mxu0 0.0
    %392 = vmatpush1.xpose.msra.mxu0 %v301
    %393 = vmatprep.subr.mxu0 0.0
    %394 = vmatpush1.xpose.msra.mxu0 %v304
    %395 = vmatprep.subr.mxu0 0.0
    %396 = vmatpush1.xpose.msra.mxu0 %v307
    %397 = vmatprep.subr.mxu0 0.0
    %398 = vmatpush1.xpose.msra.mxu0 %v310
    %399 = vmatprep.subr.mxu0 0.0
    %400 = vmatpush1.xpose.msra.mxu0 %v313
    %401 = vmatprep.subr.mxu0 0.0
    %402 = vmatpush1.xpose.msra.mxu0 %v316
    %403 = vmatprep.subr.mxu0 0.0
    %404 = vmatpush1.xpose.msra.mxu0 %v319
    %405 = vmatprep.subr.mxu0 0.0
    %406 = vmatpush1.xpose.msra.mxu0 %v322
    %407 = vmatprep.subr.mxu0 0.0
    %408 = vmatpush1.xpose.msra.mxu0 %v325
    %409 = vmatprep.subr.mxu0 0.0
    %410 = vmatpush1.xpose.msra.mxu0 %v328
    %411 = vmatprep.subr.mxu0 0.0
    %412 = vmatpush1.xpose.msra.mxu0 %v331
    %413 = vmatprep.subr.mxu0 0.0
    %414 = vmatpush1.xpose.msra.mxu0 %v334
    %415 = vmatprep.subr.mxu0 0.0
    %416 = vmatpush1.xpose.msra.mxu0 %v337
    %417 = vmatprep.subr.mxu0 0.0
    %418 = vmatpush1.xpose.msra.mxu0 %v340
    %419 = vmatprep.subr.mxu0 0.0
    %420 = vmatpush1.xpose.msra.mxu0 %v343
    %421 = vmatprep.subr.mxu0 0.0
    %422 = vmatpush1.xpose.msra.mxu0 %v346
    %423 = vmatprep.subr.mxu0 0.0
    %424 = vmatpush1.xpose.msra.mxu0 %v349
    %425 = vmatprep.subr.mxu0 0.0
    %426 = vmatpush1.xpose.msra.mxu0 %v352
    %427 = vmatprep.subr.mxu0 0.0
    %428 = vmatpush1.xpose.msra.mxu0 %v355
    %429 = vmatprep.subr.mxu0 0.0
    %430 = vmatpush1.xpose.msra.mxu0 %v358
    %431 = vmatprep.subr.mxu0 0.0
    %432 = vmatpush1.xpose.msra.mxu0 %v361
    %433 = vmatprep.subr.mxu0 0.0
    %434 = vmatpush1.xpose.msra.mxu0 %v364
    %435 = vmatprep.subr.mxu0 0.0
    %436 = vmatpush1.xpose.msra.mxu0 %v367
    %437 = vmatprep.subr.mxu0 0.0
    %438 = vmatpush1.xpose.msra.mxu0 %v370
    %439 = vmatprep.subr.mxu0 0.0
    %440 = vmatpush1.xpose.msra.mxu0 %v373
    %441 = vmatprep.subr.mxu0 0.0
    %442 = vmatpush1.xpose.msra.mxu0 %v376
    %443 = vmatprep.subr.mxu0 0.0
    %444 = vmatpush1.xpose.msra.mxu0 %v379
    %445 = vmatprep.mubr.f32.mxu0 0.0
    %446 = vmatmul.mubr.f32.gmra.mrb[0].mxu0 %v283
    %v447 = vpop.f32.mrb[0].mxu0
    %v448 = vadd.f32 0.0, %v447
    %v449 = vpop.f32.mrb[0].mxu0
    %v450 = vadd.f32 0.0, %v449
    %451 = vdwg.mxu0
    %v452 = vmul.f32 %v448, %v249
    %v453 = vmul.f32 %v450, %v249
    %v454 = vlaneseq
    %v455 = vand.u32 %v454, 127
    %v456 = vadd.s32 %v455, 128
    %s457 = smul.u32 0, 256
    %v458 = vstv %s457
    %v459 = vadd.s32 %v455, %v458
    %v460 = vadd.s32 %v456, %v458
    %v461 = vld [vmem:[%s0] sm:$0xff]
    %462 = vset.pattern.permute.xlu0 0
    %463 = vperm.xlu0 %462, %v461
    %v464 = vpop.permute.xlu0 %463
    %vm465 = vcmp.eq.s32.totalorder %v459, %v464
    %vm466 = vcmp.eq.s32.totalorder %v460, %v464
    %v467 = vsel %vm465, 1, 0
    %v468 = vsel %vm466, 1, 0
    %v469 = vcvt.s32.f32 %v467
    %v470 = vcvt.s32.f32 %v468
    %v471 = vmul.f32 %v452, 30.0
    %v472 = vmul.f32 %v453, 30.0
    %v473 = vmul.f32 %v469, 12.0
    %v474 = vmul.f32 %v470, 12.0
    %v475 = vsub.f32 %v471, %v473
    %v476 = vsub.f32 %v472, %v474
    %477 = vst [vmem:[#allocation2] sm:$0xff] %v475
    %478 = vst [vmem:[#allocation2 + $0x8] sm:$0xff] %v476
    %479 = vst [vmem:[#allocation4] sm:$0xff] %v452
    %480 = vst [vmem:[#allocation4 + $0x8] sm:$0xff] %v453
    // Predicated region
    $region14: #{tpu_custom_call.1} parent=1 // pred_check
      _
    $region15: #{tpu_custom_call.1} parent=1 // pred_check_branch
      %482 = sbr.rel (0) target = $region17
    $region16: #{tpu_custom_call.1} parent=1 // pred_region
      %s484 = ssub.s32 256, 256
      %485 = vsyncadd [#allocation3], %s484
      %s487 = sshll.u32 [#allocation2], 4
      %s488 = int_to_ptr.vmem [resolvable:$true] %s487
      %490 = dma.vmem_to_hbm [thread:$0]  %s488, 256, %s3, [#allocation3]
    $region17: #{tpu_custom_call.1} parent=1 // pred_fallthru
      _
    // Predicated region
    $region18: #{tpu_custom_call.1} parent=1 // pred_check
      _
    $region19: #{tpu_custom_call.1} parent=1 // pred_check_branch
      %492 = sbr.rel (0) target = $region21
    $region20: #{tpu_custom_call.1} parent=1 // pred_region
      %s494 = ssub.s32 256, 256
      %495 = vsyncadd [#allocation5], %s494
      %s497 = sshll.u32 [#allocation4], 4
      %s498 = int_to_ptr.vmem [resolvable:$true] %s497
      %500 = dma.vmem_to_hbm [thread:$0]  %s498, 256, %s4, [#allocation5]
    $region21: #{tpu_custom_call.1} parent=1 // pred_fallthru
      _
    // Predicated region
    $region22: #{tpu_custom_call.1} parent=1 // pred_check
      _
    $region23: #{tpu_custom_call.1} parent=1 // pred_check_branch
      %502 = sbr.rel (0) target = $region25
    $region24: #{tpu_custom_call.1} parent=1 // pred_region
      %503 = dma.done [#allocation3], 256
    $region25: #{tpu_custom_call.1} parent=1 // pred_fallthru
      _
    // Predicated region
    $region26: #{tpu_custom_call.1} parent=1 // pred_check
      _
    $region27: #{tpu_custom_call.1} parent=1 // pred_check_branch
      %505 = sbr.rel (0) target = $region29
    $region28: #{tpu_custom_call.1} parent=1 // pred_region
      %506 = dma.done [#allocation5], 256
    $region29: #{tpu_custom_call.1} parent=1 // pred_fallthru
      _
    %507 = vsyncpa [#allocation3], 1
    %508 = vsyncpa [#allocation5], 1

</llo_original>
